<compile_context>
chip_gen: v6e
topology: v6e:2x2x1
jax: 0.10.0
libtpu: 0.0.40
codegen_flags: <defaults>
</compile_context>

<pallas_src>
import jax
import jax.numpy as jnp
from jax.experimental import pallas as pl
from jax.experimental.pallas import tpu as pltpu

_LANES = 128
_MAX_BLOCK_ROWS = 2048     # 2048 x 128 int32 = 1 MiB per input block (x2 inputs, x2 buffers)
_SPLIT_ROWS = 512          # above this, force >= 2 grid steps (v7x has 2 TensorCores)
_MAX_TABLE = 64            # unrolled select tree only for small type tables (T*T <= 64)


def _round_up(x, m):
    return ((x + m - 1) // m) * m


def _sublane_multiple(dtype):
    # Native sublane packing: 8 rows for 32-bit, 16 for 16-bit, 32 for 8-bit outputs.
    return {4: 8, 2: 16, 1: 32}.get(jnp.dtype(dtype).itemsize, 8)


def _make_kernel(T, table_size, chunk_rows):
    """Build the gather kernel for a fixed type-table size.

    table_ref : SMEM (T*T,) float32, relu'd symmetric table (resident all grid steps)
    i1_ref/i2_ref : VMEM (block_rows, 128) int32 edge-type indices
    out_ref   : VMEM (block_rows, 128) gathered parameter values
    """
    P = 1 << max(0, (table_size - 1).bit_length())   # next power of two >= table_size
    nbits = P.bit_length() - 1

    def kernel(table_ref, i1_ref, i2_ref, out_ref):
        # Read the tiny table once per grid step; scalars live in sregs/SMEM.
        leaves = [table_ref[k] for k in range(table_size)]
        leaves += [jnp.float32(0.0)] * (P - table_size)   # never selected for valid idx

        block_rows = out_ref.shape[0]
        c0 = 0
        # Static Python loop over small row chunks: keeps the select tree's live
        # intermediates (<= log2(P) partials + log2(P) bit masks) within the vreg file.
        while c0 < block_rows:
            rows = min(chunk_rows, block_rows - c0)
            i1 = i1_ref[pl.ds(c0, rows), :]
            i2 = i2_ref[pl.ds(c0, rows), :]
            idx = i1 * T + i2                              # fuse in-kernel (VPU mul-add)

            if nbits == 0:
                res = jnp.full((rows, _LANES), leaves[0], dtype=jnp.float32)
            else:
                # One mask per index bit, then a depth-first binary select tree:
                # P-1 selects total instead of 2*P compare+selects of a linear chain.
                bits = [(idx & (1 << b)) != 0 for b in range(nbits)]

                def sel(lo, hi):
                    if hi - lo == 1:
                        return leaves[lo]
                    mid = (lo + hi) // 2
                    b = (hi - lo).bit_length() - 2         # bit that splits [lo, hi)
                    return jnp.where(bits[b], sel(mid, hi), sel(lo, mid))

                res = sel(0, P)

            out_ref[pl.ds(c0, rows), :] = res.astype(out_ref.dtype)
            c0 += rows

    return kernel


def lj_param(param, index1, index2):
    """JAX/Pallas equivalent of nequip _LJParam.forward."""
    if param.ndim != 2:
        # Non-matrix parameter path: forward is just relu (trivial elementwise).
        return jnp.maximum(param, 0)

    T = param.shape[0]
    out_dtype = param.dtype

    # Symmetrize once (tiny T x T op) and hoist the relu onto the table:
    # gather commutes with elementwise relu, so no per-edge relu in the kernel.
    sym = jnp.triu(param) + jnp.triu(param, 1).T
    table = jnp.maximum(sym.reshape(-1), 0).astype(jnp.float32)   # (T*T,)

    i1 = index1.astype(jnp.int32)
    i2 = index2.astype(jnp.int32)
    E = i1.shape[0]
    if E == 0:
        return jnp.zeros((0,), dtype=out_dtype)

    S = T * T
    if S > _MAX_TABLE:
        # TODO(synk): very large type tables need an in-kernel XLU/MXU gather
        # (lane dynamic-gather or one-hot matmul); fall back to XLA for that rare case.
        return table[i1 * T + i2].astype(out_dtype)

    # Lane-dense 2-D view of the raw index streams.  When E % 128 == 0 the reshape is a
    # free bitcast (no extra HBM pass); otherwise pad with zeros (sliced off below).
    pad = (-E) % _LANES
    if pad:
        i1 = jnp.pad(i1, (0, pad))
        i2 = jnp.pad(i2, (0, pad))
    rows = (E + pad) // _LANES
    i1_2d = i1.reshape(rows, _LANES)
    i2_2d = i2.reshape(rows, _LANES)

    mult = _sublane_multiple(out_dtype)
    chunk_rows = 4 * mult                       # in-kernel sub-chunk (32 rows for f32)

    if rows > _MAX_BLOCK_ROWS:
        block_rows = _MAX_BLOCK_ROWS            # multiple of 8; partial last block masked
    elif rows >= _SPLIT_ROWS:
        # >= 2 grid steps so both v7x TensorCores get work; no-op on v5e/v6e.
        block_rows = _round_up(pl.cdiv(rows, 2), mult)
    else:
        block_rows = rows                       # full-extent block is always legal
    grid = (pl.cdiv(rows, block_rows),)

    kernel = _make_kernel(T, S, chunk_rows)
    out = pl.pallas_call(
        kernel,
        out_shape=jax.ShapeDtypeStruct((rows, _LANES), out_dtype),
        grid=grid,
        in_specs=[
            # Whole flattened sym table, resident in SMEM across all grid steps.
            pl.BlockSpec(memory_space=pltpu.MemorySpace.SMEM),
            # Lane-dense edge-index tiles, auto double-buffered by Pallas.
            pl.BlockSpec((block_rows, _LANES), lambda i: (i, 0)),
            pl.BlockSpec((block_rows, _LANES), lambda i: (i, 0)),
        ],
        out_specs=pl.BlockSpec((block_rows, _LANES), lambda i: (i, 0)),
        compiler_params=pltpu.CompilerParams(
            dimension_semantics=("parallel",),
            vmem_limit_bytes=32 * 1024 * 1024,
        ),
    )(table, i1_2d, i2_2d)
    return out.reshape(-1)[:E]


def _reference(param, index1, index2):
    T = param.shape[0]
    sym = jnp.triu(param) + jnp.triu(param, 1).T
    return jnp.maximum(sym.reshape(-1)[index1 * T + index2], 0)


if __name__ == "__main__":
    key = jax.random.PRNGKey(0)
    k1, k2, k3, k4, k5, k6, k7 = jax.random.split(key, 7)

    T = 4            # number of atom types

    param = jax.random.normal(k1, (T, T), dtype=jnp.float32)

    # Case 1: tiny ragged edge count (exercises the pad path, single (1,128) block).
    E1 = 16
    i1a = jax.random.randint(k2, (E1,), 0, T, dtype=jnp.int32)
    i2a = jax.random.randint(k3, (E1,), 0, T, dtype=jnp.int32)
    out1 = jax.block_until_ready(lj_param(param, i1a, i2a))
    ref1 = _reference(param, i1a, i2a)
    assert out1.shape == (E1,)
    assert jnp.allclose(out1, ref1, atol=1e-6, rtol=1e-6)

    # Case 2: ragged medium edge count (pad path, single multi-chunk block).
    E2 = 1000
    i1b = jax.random.randint(k4, (E2,), 0, T, dtype=jnp.int32)
    i2b = jax.random.randint(k5, (E2,), 0, T, dtype=jnp.int32)
    out2 = jax.block_until_ready(lj_param(param, i1b, i2b))
    ref2 = _reference(param, i1b, i2b)
    assert out2.shape == (E2,)
    assert jnp.allclose(out2, ref2, atol=1e-6, rtol=1e-6)

    # Case 3: E % 128 == 0 (zero-copy reshape path), 2-step grid with a partial
    # last grid block and a ragged last in-kernel chunk.
    E3 = 128 * 600
    i1c = jax.random.randint(k6, (E3,), 0, T, dtype=jnp.int32)
    i2c = jax.random.randint(k7, (E3,), 0, T, dtype=jnp.int32)
    out3 = jax.block_until_ready(lj_param(param, i1c, i2c))
    ref3 = _reference(param, i1c, i2c)
    assert out3.shape == (E3,)
    assert jnp.allclose(out3, ref3, atol=1e-6, rtol=1e-6)

    print("KERNEL_OK")
</pallas_src>

<mosaic_0001>
module attributes {stable_mosaic.version = 11 : i64} {
  func.func @kernel(%arg0: i32, %arg1: memref<16xf32, #tpu.memory_space<smem>>, %arg2: memref<1x128xi32, #tpu.memory_space<vmem>>, %arg3: memref<1x128xi32, #tpu.memory_space<vmem>>, %arg4: memref<1x128xf32, #tpu.memory_space<vmem>>) attributes {dimension_semantics = [#tpu.dimension_semantics<parallel>], iteration_bounds = array<i64: 1>, scalar_prefetch = 0 : i64, scratch_operands = 0 : i64, tpu.core_type = #tpu.core_type<tc>, window_params = [{transform_indices = @transform_0, window_bounds = array<i64: 16>}, {transform_indices = @transform_1, window_bounds = array<i64: 1, 128>}, {transform_indices = @transform_2, window_bounds = array<i64: 1, 128>}, {transform_indices = @transform_3, window_bounds = array<i64: 1, 128>}]} {
    %c0 = arith.constant 0 : index
    %0 = memref.load %arg1[%c0] : memref<16xf32, #tpu.memory_space<smem>>
    %c1 = arith.constant 1 : index
    %1 = memref.load %arg1[%c1] : memref<16xf32, #tpu.memory_space<smem>>
    %c2 = arith.constant 2 : index
    %2 = memref.load %arg1[%c2] : memref<16xf32, #tpu.memory_space<smem>>
    %c3 = arith.constant 3 : index
    %3 = memref.load %arg1[%c3] : memref<16xf32, #tpu.memory_space<smem>>
    %c4 = arith.constant 4 : index
    %4 = memref.load %arg1[%c4] : memref<16xf32, #tpu.memory_space<smem>>
    %c5 = arith.constant 5 : index
    %5 = memref.load %arg1[%c5] : memref<16xf32, #tpu.memory_space<smem>>
    %c6 = arith.constant 6 : index
    %6 = memref.load %arg1[%c6] : memref<16xf32, #tpu.memory_space<smem>>
    %c7 = arith.constant 7 : index
    %7 = memref.load %arg1[%c7] : memref<16xf32, #tpu.memory_space<smem>>
    %c8 = arith.constant 8 : index
    %8 = memref.load %arg1[%c8] : memref<16xf32, #tpu.memory_space<smem>>
    %c9 = arith.constant 9 : index
    %9 = memref.load %arg1[%c9] : memref<16xf32, #tpu.memory_space<smem>>
    %c10 = arith.constant 10 : index
    %10 = memref.load %arg1[%c10] : memref<16xf32, #tpu.memory_space<smem>>
    %c11 = arith.constant 11 : index
    %11 = memref.load %arg1[%c11] : memref<16xf32, #tpu.memory_space<smem>>
    %c12 = arith.constant 12 : index
    %12 = memref.load %arg1[%c12] : memref<16xf32, #tpu.memory_space<smem>>
    %c13 = arith.constant 13 : index
    %13 = memref.load %arg1[%c13] : memref<16xf32, #tpu.memory_space<smem>>
    %c14 = arith.constant 14 : index
    %14 = memref.load %arg1[%c14] : memref<16xf32, #tpu.memory_space<smem>>
    %c15 = arith.constant 15 : index
    %15 = memref.load %arg1[%c15] : memref<16xf32, #tpu.memory_space<smem>>
    %c0_0 = arith.constant 0 : index
    %c0_1 = arith.constant 0 : index
    %16 = vector.load %arg2[%c0_0, %c0_1] : memref<1x128xi32, #tpu.memory_space<vmem>>, vector<1x128xi32>
    %c0_2 = arith.constant 0 : index
    %c0_3 = arith.constant 0 : index
    %17 = vector.load %arg3[%c0_2, %c0_3] : memref<1x128xi32, #tpu.memory_space<vmem>>, vector<1x128xi32>
    %c4_i32 = arith.constant 4 : i32
    %18 = vector.broadcast %c4_i32 : i32 to vector<1x128xi32>
    %19 = arith.muli %16, %18 : vector<1x128xi32>
    %20 = arith.addi %19, %17 : vector<1x128xi32>
    %c1_i32 = arith.constant 1 : i32
    %21 = vector.broadcast %c1_i32 : i32 to vector<1x128xi32>
    %22 = arith.andi %20, %21 : vector<1x128xi32>
    %c0_i32 = arith.constant 0 : i32
    %23 = vector.broadcast %c0_i32 : i32 to vector<1x128xi32>
    %24 = arith.cmpi ne, %22, %23 : vector<1x128xi32>
    %c2_i32 = arith.constant 2 : i32
    %25 = vector.broadcast %c2_i32 : i32 to vector<1x128xi32>
    %26 = arith.andi %20, %25 : vector<1x128xi32>
    %c0_i32_4 = arith.constant 0 : i32
    %27 = vector.broadcast %c0_i32_4 : i32 to vector<1x128xi32>
    %28 = arith.cmpi ne, %26, %27 : vector<1x128xi32>
    %c4_i32_5 = arith.constant 4 : i32
    %29 = vector.broadcast %c4_i32_5 : i32 to vector<1x128xi32>
    %30 = arith.andi %20, %29 : vector<1x128xi32>
    %c0_i32_6 = arith.constant 0 : i32
    %31 = vector.broadcast %c0_i32_6 : i32 to vector<1x128xi32>
    %32 = arith.cmpi ne, %30, %31 : vector<1x128xi32>
    %c8_i32 = arith.constant 8 : i32
    %33 = vector.broadcast %c8_i32 : i32 to vector<1x128xi32>
    %34 = arith.andi %20, %33 : vector<1x128xi32>
    %c0_i32_7 = arith.constant 0 : i32
    %35 = vector.broadcast %c0_i32_7 : i32 to vector<1x128xi32>
    %36 = arith.cmpi ne, %34, %35 : vector<1x128xi32>
    %37 = vector.broadcast %15 : f32 to vector<1x128xf32>
    %38 = vector.broadcast %14 : f32 to vector<1x128xf32>
    %39 = arith.select %24, %37, %38 : vector<1x128xi1>, vector<1x128xf32>
    %40 = vector.broadcast %13 : f32 to vector<1x128xf32>
    %41 = vector.broadcast %12 : f32 to vector<1x128xf32>
    %42 = arith.select %24, %40, %41 : vector<1x128xi1>, vector<1x128xf32>
    %43 = arith.select %28, %39, %42 : vector<1x128xi1>, vector<1x128xf32>
    %44 = vector.broadcast %11 : f32 to vector<1x128xf32>
    %45 = vector.broadcast %10 : f32 to vector<1x128xf32>
    %46 = arith.select %24, %44, %45 : vector<1x128xi1>, vector<1x128xf32>
    %47 = vector.broadcast %9 : f32 to vector<1x128xf32>
    %48 = vector.broadcast %8 : f32 to vector<1x128xf32>
    %49 = arith.select %24, %47, %48 : vector<1x128xi1>, vector<1x128xf32>
    %50 = arith.select %28, %46, %49 : vector<1x128xi1>, vector<1x128xf32>
    %51 = arith.select %32, %43, %50 : vector<1x128xi1>, vector<1x128xf32>
    %52 = vector.broadcast %7 : f32 to vector<1x128xf32>
    %53 = vector.broadcast %6 : f32 to vector<1x128xf32>
    %54 = arith.select %24, %52, %53 : vector<1x128xi1>, vector<1x128xf32>
    %55 = vector.broadcast %5 : f32 to vector<1x128xf32>
    %56 = vector.broadcast %4 : f32 to vector<1x128xf32>
    %57 = arith.select %24, %55, %56 : vector<1x128xi1>, vector<1x128xf32>
    %58 = arith.select %28, %54, %57 : vector<1x128xi1>, vector<1x128xf32>
    %59 = vector.broadcast %3 : f32 to vector<1x128xf32>
    %60 = vector.broadcast %2 : f32 to vector<1x128xf32>
    %61 = arith.select %24, %59, %60 : vector<1x128xi1>, vector<1x128xf32>
    %62 = vector.broadcast %1 : f32 to vector<1x128xf32>
    %63 = vector.broadcast %0 : f32 to vector<1x128xf32>
    %64 = arith.select %24, %62, %63 : vector<1x128xi1>, vector<1x128xf32>
    %65 = arith.select %28, %61, %64 : vector<1x128xi1>, vector<1x128xf32>
    %66 = arith.select %32, %58, %65 : vector<1x128xi1>, vector<1x128xf32>
    %67 = arith.select %36, %51, %66 : vector<1x128xi1>, vector<1x128xf32>
    %c0_8 = arith.constant 0 : index
    %c0_9 = arith.constant 0 : index
    %68 = vector.load %arg4[%c0_8, %c0_9] : memref<1x128xf32, #tpu.memory_space<vmem>>, vector<1x128xf32>
    tpu.vector_store %arg4[%c0_8, %c0_9], %67 {strides = array<i32>} : memref<1x128xf32, #tpu.memory_space<vmem>>, vector<1x128xf32>,
    return
  }
  func.func @transform_0(%arg0: i32) -> i32 {
    %c0_i32 = arith.constant 0 : i32
    %c0_i32_0 = arith.constant 0 : i32
    return %c0_i32 : i32
  }
  func.func @transform_1(%arg0: i32) -> (i32, i32) {
    %c0_i32 = arith.constant 0 : i32
    %c0_i32_0 = arith.constant 0 : i32
    return %arg0, %c0_i32 : i32, i32
  }
  func.func @transform_2(%arg0: i32) -> (i32, i32) {
    %c0_i32 = arith.constant 0 : i32
    %c0_i32_0 = arith.constant 0 : i32
    return %arg0, %c0_i32 : i32, i32
  }
  func.func @transform_3(%arg0: i32) -> (i32, i32) {
    %c0_i32 = arith.constant 0 : i32
    %c0_i32_0 = arith.constant 0 : i32
    return %arg0, %c0_i32 : i32, i32
  }
}

</mosaic_0001>

<llo_original>
// kernel: tpu_custom_call.1
$region0: #{tpu_custom_call.1}
  #allocation0 [shape = 'u32[]', space=smem, size = 0x4, offset = 0x4, fixed_abs, tag = 'smem constant byte address 0x4 - core index']
  #allocation1 [shape = 'u32[144,128]{1,0:T(1,128)}', space=vmem, size = 0x12000, scoped, tag = 'internal scratch']
  %s0 = inlined_call_operand.hbm [shape: f32[16], index: 0, kind: input, shape index: {}]
  %s1 = inlined_call_operand.vmem [shape: s32[1,128], index: 1, kind: input, shape index: {}]
  %s2 = inlined_call_operand.vmem [shape: s32[1,128], index: 2, kind: input, shape index: {}]
  %s3 = inlined_call_operand.hbm [shape: f32[1,128], index: 3, kind: output, shape index: {}]
  %s4 = sld [smem:[#allocation0]]
  $region26: #{tpu_custom_call.1} parent=0
    _
  %s6 = ssub.s32 1, %s4
  %s7 = scalar_select 0, %s6, %s4
  $region1: #{tpu_custom_call.1} parent=0
    #allocation2 [shape = 'u8[512]{0}', space=smem, size = 0x200, scoped, tag = 'input window, operand 0, single buffered']
    #allocation3 [shape = 's32[1]{0}', space=sflag, size = 0x4, scoped, tag = 'scoped memory for tpu_custom_call.1']
    #allocation4 [shape = 's32[1]{0}', space=sflag, size = 0x4, scoped, tag = 'scoped memory for tpu_custom_call.1']
    #allocation5 [shape = 'u8[512]{0}', space=vmem, size = 0x400, scoped, tag = 'output window, operand 0, single buffered']
    %8 = vsyncpa [#allocation4], 0
    %9 = vsyncpa [#allocation3], 0
    // Predicated region
    $region2: #{tpu_custom_call.1} parent=1 // pred_check
      _
    $region3: #{tpu_custom_call.1} parent=1 // pred_check_branch
      %11 = sbr.rel (0) target = $region5
    $region4: #{tpu_custom_call.1} parent=1 // pred_region
      %s13 = ssub.s32 16, 16
      %14 = vsyncadd [#allocation4], %s13
      %17 = dma.hbm_to_smem %s0, 16, [#allocation2], [#allocation4]
    $region5: #{tpu_custom_call.1} parent=1 // pred_fallthru
      _
    // Predicated region
    $region6: #{tpu_custom_call.1} parent=1 // pred_check
      _
    $region7: #{tpu_custom_call.1} parent=1 // pred_check_branch
      %19 = sbr.rel (0) target = $region9
    $region8: #{tpu_custom_call.1} parent=1 // pred_region
      _
    $region9: #{tpu_custom_call.1} parent=1 // pred_fallthru
      _
    // Predicated region
    $region10: #{tpu_custom_call.1} parent=1 // pred_check
      _
    $region11: #{tpu_custom_call.1} parent=1 // pred_check_branch
      %21 = sbr.rel (0) target = $region13
    $region12: #{tpu_custom_call.1} parent=1 // pred_region
      _
    $region13: #{tpu_custom_call.1} parent=1 // pred_fallthru
      _
    // Predicated region
    $region14: #{tpu_custom_call.1} parent=1 // pred_check
      _
    $region15: #{tpu_custom_call.1} parent=1 // pred_check_branch
      %23 = sbr.rel (0) target = $region17
    $region16: #{tpu_custom_call.1} parent=1 // pred_region
      %24 = dma.done [#allocation4], 16
    $region17: #{tpu_custom_call.1} parent=1 // pred_fallthru
      _
    %25 = sfence
    %s26 = sld [smem:[#allocation2]]
    %s27 = sld [smem:[#allocation2 + $0x1]]
    %s28 = sld [smem:[#allocation2 + $0x2]]
    %s29 = sld [smem:[#allocation2 + $0x3]]
    %s30 = sld [smem:[#allocation2 + $0x4]]
    %s31 = sld [smem:[#allocation2 + $0x5]]
    %s32 = sld [smem:[#allocation2 + $0x6]]
    %s33 = sld [smem:[#allocation2 + $0x7]]
    %s34 = sld [smem:[#allocation2 + $0x8]]
    %s35 = sld [smem:[#allocation2 + $0x9]]
    %s36 = sld [smem:[#allocation2 + $0xa]]
    %s37 = sld [smem:[#allocation2 + $0xb]]
    %s38 = sld [smem:[#allocation2 + $0xc]]
    %s39 = sld [smem:[#allocation2 + $0xd]]
    %s40 = sld [smem:[#allocation2 + $0xe]]
    %s41 = sld [smem:[#allocation2 + $0xf]]
    %v42 = vld [vmem:[%s1] sm:$0x1]
    %v43 = vld [vmem:[%s2] sm:$0x1]
    %v44 = vmul.u32 %v42, 4
    %v45 = vadd.s32 %v44, %v43
    %v46 = vand.u32 %v45, 1
    %vm47 = vcmp.ne.s32.totalorder %v46, 0
    %v48 = vand.u32 %v45, 2
    %vm49 = vcmp.ne.s32.totalorder %v48, 0
    %v50 = vand.u32 %v45, 4
    %vm51 = vcmp.ne.s32.totalorder %v50, 0
    %v52 = vand.u32 %v45, 8
    %vm53 = vcmp.ne.s32.totalorder %v52, 0
    %v54 = vstv %s41
    %v55 = vstv %s40
    %v56 = vsel %vm47, %v54, %v55
    %v57 = vstv %s39
    %v58 = vstv %s38
    %v59 = vsel %vm47, %v57, %v58
    %v60 = vsel %vm49, %v56, %v59
    %v61 = vstv %s37
    %v62 = vstv %s36
    %v63 = vsel %vm47, %v61, %v62
    %v64 = vstv %s35
    %v65 = vstv %s34
    %v66 = vsel %vm47, %v64, %v65
    %v67 = vsel %vm49, %v63, %v66
    %v68 = vsel %vm51, %v60, %v67
    %v69 = vstv %s33
    %v70 = vstv %s32
    %v71 = vsel %vm47, %v69, %v70
    %v72 = vstv %s31
    %v73 = vstv %s30
    %v74 = vsel %vm47, %v72, %v73
    %v75 = vsel %vm49, %v71, %v74
    %v76 = vstv %s29
    %v77 = vstv %s28
    %v78 = vsel %vm47, %v76, %v77
    %v79 = vstv %s27
    %v80 = vstv %s26
    %v81 = vsel %vm47, %v79, %v80
    %v82 = vsel %vm49, %v78, %v81
    %v83 = vsel %vm51, %v75, %v82
    %v84 = vsel %vm53, %v68, %v83
    %85 = vst [vmem:[#allocation5] sm:$0x1] %v84
    // Predicated region
    $region18: #{tpu_custom_call.1} parent=1 // pred_check
      _
    $region19: #{tpu_custom_call.1} parent=1 // pred_check_branch
      %87 = sbr.rel (0) target = $region21
    $region20: #{tpu_custom_call.1} parent=1 // pred_region
      %s89 = ssub.s32 16, 16
      %90 = vsyncadd [#allocation3], %s89
      %s92 = sshll.u32 [#allocation5], 4
      %s93 = int_to_ptr.vmem [resolvable:$true] %s92
      %95 = dma.vmem_to_hbm [thread:$0]  %s93, 16, %s3, [#allocation3]
    $region21: #{tpu_custom_call.1} parent=1 // pred_fallthru
      _
    // Predicated region
    $region22: #{tpu_custom_call.1} parent=1 // pred_check
      _
    $region23: #{tpu_custom_call.1} parent=1 // pred_check_branch
      %97 = sbr.rel (0) target = $region25
    $region24: #{tpu_custom_call.1} parent=1 // pred_region
      %98 = dma.done [#allocation3], 16
    $region25: #{tpu_custom_call.1} parent=1 // pred_fallthru
      _
    %99 = vsyncpa [#allocation3], 1
    %100 = vsyncpa [#allocation4], 1

</llo_original>
